<compile_context>
chip_gen: v5e
topology: v5e:2x2
jax: 0.10.0
libtpu: 0.0.40
codegen_flags: <defaults>
</compile_context>

<pallas_src>
import functools

import jax
import jax.numpy as jnp
from jax.experimental import pallas as pl
from jax.experimental.pallas import tpu as pltpu

LANE = 128  # output lane padding


def _round_up(x, m):
    return (x + m - 1) // m * m


def _length_prior_kernel(x_ref, w0_ref, wh_ref, bh_ref, wm_ref, bm_ref,
                         wo_ref, bo_ref, out_ref):
    """One batch tile: full MLP forward + log_softmax over (lane-padded) lengths."""
    h = x_ref[...].astype(jnp.float32)          # (bm, input_dim)
    bh = bh_ref[...]                            # (n_hidden_biases, H) f32

    # Layer 0: input_dim -> H, ReLU. bf16 matmul inputs, f32 accumulation.
    h = jnp.dot(h.astype(jnp.bfloat16), w0_ref[...],
                preferred_element_type=jnp.float32)
    h = jnp.maximum(h + bh[0:1, :], 0.0)

    # Stacked H -> H hidden layers, ReLU. Static index into the weight stack.
    for i in range(wh_ref.shape[0]):
        h = jnp.dot(h.astype(jnp.bfloat16), wh_ref[i],
                    preferred_element_type=jnp.float32)
        h = jnp.maximum(h + bh[i + 1:i + 2, :], 0.0)

    # Midway: H -> 32, ReLU.
    h = jnp.dot(h.astype(jnp.bfloat16), wm_ref[...],
                preferred_element_type=jnp.float32)
    h = jnp.maximum(h + bm_ref[...], 0.0)

    # Output head kept in f32 (tiny); lane-padded columns carry a -1e30 bias so
    # they vanish under softmax. Then numerically-stable log_softmax.
    logits = jnp.dot(h, wo_ref[...], preferred_element_type=jnp.float32) + bo_ref[...]
    m = jnp.max(logits, axis=-1, keepdims=True)
    shifted = logits - m
    lse = jnp.log(jnp.sum(jnp.exp(shifted), axis=-1, keepdims=True))
    out_ref[...] = (shifted - lse).astype(out_ref.dtype)


@functools.partial(jax.jit, static_argnames=("lengths",))
def length_prior_forward(observation, packed_params, *, lengths=3):
    """observation: (batch, input_dim) f32.
    packed_params: (w0, wh, bh, wm, bm, wo_pad, bo_pad) from init_params()."""
    w0, wh, bh, wm, bm, wo_pad, bo_pad = packed_params
    batch, input_dim = observation.shape
    H = w0.shape[1]
    mid = wm.shape[1]

    # Batch tile: big enough to feed the MXU when the caller batches up,
    # rounded to the 8-sublane granularity for small batches.
    block_m = 256 if batch >= 256 else max(8, _round_up(batch, 8))
    padded = _round_up(batch, block_m)

    x = observation.astype(jnp.float32)
    if padded != batch:
        x = jnp.pad(x, ((0, padded - batch), (0, 0)))

    grid = (padded // block_m,)
    const2 = lambda i: (0, 0)
    const3 = lambda i: (0, 0, 0)

    flops = 2 * padded * (input_dim * H + wh.shape[0] * H * H + H * mid + mid * LANE)
    bytes_accessed = (
        sum(int(a.size) * a.dtype.itemsize for a in (w0, wh, bh, wm, bm, wo_pad, bo_pad))
        + int(x.size) * 4 + padded * LANE * 4)
    cost = pl.CostEstimate(flops=flops,
                           transcendentals=padded * (LANE + 1),
                           bytes_accessed=bytes_accessed)

    out = pl.pallas_call(
        _length_prior_kernel,
        out_shape=jax.ShapeDtypeStruct((padded, LANE), jnp.float32),
        grid=grid,
        in_specs=[
            pl.BlockSpec((block_m, input_dim), lambda i: (i, 0)),  # x tile
            pl.BlockSpec(w0.shape, const2),      # resident across grid steps
            pl.BlockSpec(wh.shape, const3),
            pl.BlockSpec(bh.shape, const2),
            pl.BlockSpec(wm.shape, const2),
            pl.BlockSpec(bm.shape, const2),
            pl.BlockSpec(wo_pad.shape, const2),
            pl.BlockSpec(bo_pad.shape, const2),
        ],
        out_specs=pl.BlockSpec((block_m, LANE), lambda i: (i, 0)),
        compiler_params=pltpu.CompilerParams(dimension_semantics=("parallel",)),
        cost_estimate=cost,
    )(x, w0, wh, bh, wm, bm, wo_pad, bo_pad)

    return out[:batch, :lengths]


def init_params(key, input_dim, net_arch, lengths, midway_dim=32):
    """Deterministic synthetic parameters, packed for the kernel.

    Weight matrices are stored (in_features, out_features) — transpose of the
    PyTorch nn.Linear layout — so the kernel computes h @ W + b.
    Hidden/midway weights are bf16; biases and the output head stay f32.
    """
    assert len(net_arch) >= 2 and all(h == net_arch[0] for h in net_arch), \
        "stacked-weight packing assumes uniform hidden width"
    H = net_arch[0]
    dims = [input_dim] + list(net_arch) + [midway_dim, lengths]
    ws, bs = [], []
    for i in range(len(dims) - 1):
        key, wk, bk = jax.random.split(key, 3)
        fan_in, fan_out = dims[i], dims[i + 1]
        scale = 1.0 / jnp.sqrt(jnp.float32(fan_in))
        ws.append(jax.random.uniform(wk, (fan_in, fan_out), jnp.float32,
                                     minval=-scale, maxval=scale))
        bs.append(jax.random.uniform(bk, (fan_out,), jnp.float32,
                                     minval=-scale, maxval=scale))

    n_hidden = len(net_arch)
    w0 = ws[0].astype(jnp.bfloat16)                         # (input_dim, H)
    wh = jnp.stack(ws[1:n_hidden], 0).astype(jnp.bfloat16)  # (n_hidden-1, H, H)
    bh = jnp.stack(bs[0:n_hidden], 0)                       # (n_hidden, H) f32
    wm = ws[n_hidden].astype(jnp.bfloat16)                  # (H, midway_dim)
    bm = bs[n_hidden].reshape(1, -1)                        # (1, midway_dim) f32
    wo = ws[-1]                                             # (midway_dim, lengths) f32
    bo = bs[-1]                                             # (lengths,) f32
    wo_pad = jnp.zeros((midway_dim, LANE), jnp.float32).at[:, :lengths].set(wo)
    bo_pad = jnp.full((1, LANE), -1e30, jnp.float32).at[0, :lengths].set(bo)
    return (w0, wh, bh, wm, bm, wo_pad, bo_pad)


def reference_forward(observation, packed_params, lengths):
    """Pure-JAX reference mirroring the kernel's bf16 weight/activation rounding."""
    w0, wh, bh, wm, bm, wo_pad, bo_pad = packed_params

    def bf(a):  # round activations through bf16, as the kernel does at matmul inputs
        return a.astype(jnp.bfloat16).astype(jnp.float32)

    h = observation.astype(jnp.float32)
    h = jnp.maximum(bf(h) @ w0.astype(jnp.float32) + bh[0:1, :], 0.0)
    for i in range(wh.shape[0]):
        h = jnp.maximum(bf(h) @ wh[i].astype(jnp.float32) + bh[i + 1:i + 2, :], 0.0)
    h = jnp.maximum(bf(h) @ wm.astype(jnp.float32) + bm, 0.0)
    logits = h @ wo_pad[:, :lengths] + bo_pad[:, :lengths]
    return jax.nn.log_softmax(logits, axis=1)


if __name__ == "__main__":
    input_dim = 32
    net_arch = [128] * 6
    lengths = 3
    batch = 8

    key = jax.random.PRNGKey(0)
    key, xk, pk = jax.random.split(key, 3)
    observation = jax.random.normal(xk, (batch, input_dim), jnp.float32)
    params = init_params(pk, input_dim, net_arch, lengths)

    out = length_prior_forward(observation, params, lengths=lengths)
    out = jax.block_until_ready(out)

    ref = reference_forward(observation, params, lengths)
    assert out.shape == (batch, lengths)
    # bf16 weights match the bf16-rounded reference; remaining diff is f32
    # accumulation-order noise only.
    assert jnp.allclose(out, ref, atol=1e-3, rtol=1e-3), "mismatch vs reference"
    # log_softmax rows must (log-)normalize.
    assert jnp.allclose(jnp.sum(jnp.exp(out), axis=1), 1.0, atol=1e-4)

    print("KERNEL_OK")
</pallas_src>

<mosaic_0001>
module attributes {stable_mosaic.version = 11 : i64} {
  func.func @_length_prior_kernel(%arg0: i32, %arg1: memref<8x32xf32, #tpu.memory_space<vmem>>, %arg2: memref<32x128xbf16, #tpu.memory_space<vmem>>, %arg3: memref<5x128x128xbf16, #tpu.memory_space<vmem>>, %arg4: memref<6x128xf32, #tpu.memory_space<vmem>>, %arg5: memref<128x32xbf16, #tpu.memory_space<vmem>>, %arg6: memref<1x32xf32, #tpu.memory_space<vmem>>, %arg7: memref<32x128xf32, #tpu.memory_space<vmem>>, %arg8: memref<1x128xf32, #tpu.memory_space<vmem>>, %arg9: memref<8x128xf32, #tpu.memory_space<vmem>>) attributes {dimension_semantics = [#tpu.dimension_semantics<parallel>], iteration_bounds = array<i64: 1>, scalar_prefetch = 0 : i64, scratch_operands = 0 : i64, tpu.core_type = #tpu.core_type<tc>, window_params = [{transform_indices = @transform_0, window_bounds = array<i64: 8, 32>}, {pipeline_mode = #tpu.pipeline_mode<synchronous>, transform_indices = @transform_1, window_bounds = array<i64: 32, 128>}, {pipeline_mode = #tpu.pipeline_mode<synchronous>, transform_indices = @transform_2, window_bounds = array<i64: 5, 128, 128>}, {pipeline_mode = #tpu.pipeline_mode<synchronous>, transform_indices = @transform_3, window_bounds = array<i64: 6, 128>}, {pipeline_mode = #tpu.pipeline_mode<synchronous>, transform_indices = @transform_4, window_bounds = array<i64: 128, 32>}, {pipeline_mode = #tpu.pipeline_mode<synchronous>, transform_indices = @transform_5, window_bounds = array<i64: 1, 32>}, {pipeline_mode = #tpu.pipeline_mode<synchronous>, transform_indices = @transform_6, window_bounds = array<i64: 32, 128>}, {pipeline_mode = #tpu.pipeline_mode<synchronous>, transform_indices = @transform_7, window_bounds = array<i64: 1, 128>}, {transform_indices = @transform_8, window_bounds = array<i64: 8, 128>}]} {
    %c0 = arith.constant 0 : index
    %c0_0 = arith.constant 0 : index
    %0 = vector.load %arg1[%c0, %c0_0] : memref<8x32xf32, #tpu.memory_space<vmem>>, vector<8x32xf32>
    %c0_1 = arith.constant 0 : index
    %c0_2 = arith.constant 0 : index
    %1 = vector.load %arg4[%c0_1, %c0_2] : memref<6x128xf32, #tpu.memory_space<vmem>>, vector<6x128xf32>
    %2 = arith.truncf %0 : vector<8x32xf32> to vector<8x32xbf16>
    %c0_3 = arith.constant 0 : index
    %c0_4 = arith.constant 0 : index
    %3 = vector.load %arg2[%c0_3, %c0_4] : memref<32x128xbf16, #tpu.memory_space<vmem>>, vector<32x128xbf16>
    %cst = arith.constant dense<0.000000e+00> : vector<8x128xf32>
    %4 = tpu.matmul %2, %3, %cst {dimension_numbers = #tpu.dot_dimension_numbers<[1], [0], [0], [1], [0, 0, 1, 1], [], []>} : vector<8x32xbf16>, vector<32x128xbf16>, vector<8x128xf32> -> vector<8x128xf32>
    %5 = vector.extract_strided_slice %1 {offsets = [0, 0], sizes = [1, 128], strides = [1, 1]} : vector<6x128xf32> to vector<1x128xf32>
    %6 = vector.broadcast %5 : vector<1x128xf32> to vector<8x128xf32>
    %7 = arith.addf %4, %6 : vector<8x128xf32>
    %cst_5 = arith.constant 0.000000e+00 : f32
    %8 = vector.broadcast %cst_5 : f32 to vector<8x128xf32>
    %9 = arith.maximumf %7, %8 : vector<8x128xf32>
    %10 = arith.truncf %9 : vector<8x128xf32> to vector<8x128xbf16>
    %c0_6 = arith.constant 0 : index
    %c0_7 = arith.constant 0 : index
    %c0_8 = arith.constant 0 : index
    %11 = vector.load %arg3[%c0_6, %c0_7, %c0_8] : memref<5x128x128xbf16, #tpu.memory_space<vmem>>, vector<1x128x128xbf16>
    %12 = vector.shape_cast %11 : vector<1x128x128xbf16> to vector<128x128xbf16>
    %cst_9 = arith.constant dense<0.000000e+00> : vector<8x128xf32>
    %13 = tpu.matmul %10, %12, %cst_9 {dimension_numbers = #tpu.dot_dimension_numbers<[1], [0], [0], [1], [0, 0, 1, 1], [], []>} : vector<8x128xbf16>, vector<128x128xbf16>, vector<8x128xf32> -> vector<8x128xf32>
    %14 = vector.extract_strided_slice %1 {offsets = [1, 0], sizes = [1, 128], strides = [1, 1]} : vector<6x128xf32> to vector<1x128xf32>
    %15 = vector.broadcast %14 : vector<1x128xf32> to vector<8x128xf32>
    %16 = arith.addf %13, %15 : vector<8x128xf32>
    %cst_10 = arith.constant 0.000000e+00 : f32
    %17 = vector.broadcast %cst_10 : f32 to vector<8x128xf32>
    %18 = arith.maximumf %16, %17 : vector<8x128xf32>
    %19 = arith.truncf %18 : vector<8x128xf32> to vector<8x128xbf16>
    %c1 = arith.constant 1 : index
    %c0_11 = arith.constant 0 : index
    %c0_12 = arith.constant 0 : index
    %20 = vector.load %arg3[%c1, %c0_11, %c0_12] : memref<5x128x128xbf16, #tpu.memory_space<vmem>>, vector<1x128x128xbf16>
    %21 = vector.shape_cast %20 : vector<1x128x128xbf16> to vector<128x128xbf16>
    %cst_13 = arith.constant dense<0.000000e+00> : vector<8x128xf32>
    %22 = tpu.matmul %19, %21, %cst_13 {dimension_numbers = #tpu.dot_dimension_numbers<[1], [0], [0], [1], [0, 0, 1, 1], [], []>} : vector<8x128xbf16>, vector<128x128xbf16>, vector<8x128xf32> -> vector<8x128xf32>
    %23 = vector.extract_strided_slice %1 {offsets = [2, 0], sizes = [1, 128], strides = [1, 1]} : vector<6x128xf32> to vector<1x128xf32>
    %24 = vector.broadcast %23 : vector<1x128xf32> to vector<8x128xf32>
    %25 = arith.addf %22, %24 : vector<8x128xf32>
    %cst_14 = arith.constant 0.000000e+00 : f32
    %26 = vector.broadcast %cst_14 : f32 to vector<8x128xf32>
    %27 = arith.maximumf %25, %26 : vector<8x128xf32>
    %28 = arith.truncf %27 : vector<8x128xf32> to vector<8x128xbf16>
    %c2 = arith.constant 2 : index
    %c0_15 = arith.constant 0 : index
    %c0_16 = arith.constant 0 : index
    %29 = vector.load %arg3[%c2, %c0_15, %c0_16] : memref<5x128x128xbf16, #tpu.memory_space<vmem>>, vector<1x128x128xbf16>
    %30 = vector.shape_cast %29 : vector<1x128x128xbf16> to vector<128x128xbf16>
    %cst_17 = arith.constant dense<0.000000e+00> : vector<8x128xf32>
    %31 = tpu.matmul %28, %30, %cst_17 {dimension_numbers = #tpu.dot_dimension_numbers<[1], [0], [0], [1], [0, 0, 1, 1], [], []>} : vector<8x128xbf16>, vector<128x128xbf16>, vector<8x128xf32> -> vector<8x128xf32>
    %32 = vector.extract_strided_slice %1 {offsets = [3, 0], sizes = [1, 128], strides = [1, 1]} : vector<6x128xf32> to vector<1x128xf32>
    %33 = vector.broadcast %32 : vector<1x128xf32> to vector<8x128xf32>
    %34 = arith.addf %31, %33 : vector<8x128xf32>
    %cst_18 = arith.constant 0.000000e+00 : f32
    %35 = vector.broadcast %cst_18 : f32 to vector<8x128xf32>
    %36 = arith.maximumf %34, %35 : vector<8x128xf32>
    %37 = arith.truncf %36 : vector<8x128xf32> to vector<8x128xbf16>
    %c3 = arith.constant 3 : index
    %c0_19 = arith.constant 0 : index
    %c0_20 = arith.constant 0 : index
    %38 = vector.load %arg3[%c3, %c0_19, %c0_20] : memref<5x128x128xbf16, #tpu.memory_space<vmem>>, vector<1x128x128xbf16>
    %39 = vector.shape_cast %38 : vector<1x128x128xbf16> to vector<128x128xbf16>
    %cst_21 = arith.constant dense<0.000000e+00> : vector<8x128xf32>
    %40 = tpu.matmul %37, %39, %cst_21 {dimension_numbers = #tpu.dot_dimension_numbers<[1], [0], [0], [1], [0, 0, 1, 1], [], []>} : vector<8x128xbf16>, vector<128x128xbf16>, vector<8x128xf32> -> vector<8x128xf32>
    %41 = vector.extract_strided_slice %1 {offsets = [4, 0], sizes = [1, 128], strides = [1, 1]} : vector<6x128xf32> to vector<1x128xf32>
    %42 = vector.broadcast %41 : vector<1x128xf32> to vector<8x128xf32>
    %43 = arith.addf %40, %42 : vector<8x128xf32>
    %cst_22 = arith.constant 0.000000e+00 : f32
    %44 = vector.broadcast %cst_22 : f32 to vector<8x128xf32>
    %45 = arith.maximumf %43, %44 : vector<8x128xf32>
    %46 = arith.truncf %45 : vector<8x128xf32> to vector<8x128xbf16>
    %c4 = arith.constant 4 : index
    %c0_23 = arith.constant 0 : index
    %c0_24 = arith.constant 0 : index
    %47 = vector.load %arg3[%c4, %c0_23, %c0_24] : memref<5x128x128xbf16, #tpu.memory_space<vmem>>, vector<1x128x128xbf16>
    %48 = vector.shape_cast %47 : vector<1x128x128xbf16> to vector<128x128xbf16>
    %cst_25 = arith.constant dense<0.000000e+00> : vector<8x128xf32>
    %49 = tpu.matmul %46, %48, %cst_25 {dimension_numbers = #tpu.dot_dimension_numbers<[1], [0], [0], [1], [0, 0, 1, 1], [], []>} : vector<8x128xbf16>, vector<128x128xbf16>, vector<8x128xf32> -> vector<8x128xf32>
    %50 = vector.extract_strided_slice %1 {offsets = [5, 0], sizes = [1, 128], strides = [1, 1]} : vector<6x128xf32> to vector<1x128xf32>
    %51 = vector.broadcast %50 : vector<1x128xf32> to vector<8x128xf32>
    %52 = arith.addf %49, %51 : vector<8x128xf32>
    %cst_26 = arith.constant 0.000000e+00 : f32
    %53 = vector.broadcast %cst_26 : f32 to vector<8x128xf32>
    %54 = arith.maximumf %52, %53 : vector<8x128xf32>
    %55 = arith.truncf %54 : vector<8x128xf32> to vector<8x128xbf16>
    %c0_27 = arith.constant 0 : index
    %c0_28 = arith.constant 0 : index
    %56 = vector.load %arg5[%c0_27, %c0_28] : memref<128x32xbf16, #tpu.memory_space<vmem>>, vector<128x32xbf16>
    %cst_29 = arith.constant dense<0.000000e+00> : vector<8x32xf32>
    %57 = tpu.matmul %55, %56, %cst_29 {dimension_numbers = #tpu.dot_dimension_numbers<[1], [0], [0], [1], [0, 0, 1, 1], [], []>} : vector<8x128xbf16>, vector<128x32xbf16>, vector<8x32xf32> -> vector<8x32xf32>
    %c0_30 = arith.constant 0 : index
    %c0_31 = arith.constant 0 : index
    %58 = vector.load %arg6[%c0_30, %c0_31] : memref<1x32xf32, #tpu.memory_space<vmem>>, vector<1x32xf32>
    %59 = vector.broadcast %58 : vector<1x32xf32> to vector<8x32xf32>
    %60 = arith.addf %57, %59 : vector<8x32xf32>
    %cst_32 = arith.constant 0.000000e+00 : f32
    %61 = vector.broadcast %cst_32 : f32 to vector<8x32xf32>
    %62 = arith.maximumf %60, %61 : vector<8x32xf32>
    %c0_33 = arith.constant 0 : index
    %c0_34 = arith.constant 0 : index
    %63 = vector.load %arg7[%c0_33, %c0_34] : memref<32x128xf32, #tpu.memory_space<vmem>>, vector<32x128xf32>
    %cst_35 = arith.constant dense<0.000000e+00> : vector<8x128xf32>
    %64 = tpu.matmul %62, %63, %cst_35 {dimension_numbers = #tpu.dot_dimension_numbers<[1], [0], [0], [1], [0, 0, 1, 1], [], []>} : vector<8x32xf32>, vector<32x128xf32>, vector<8x128xf32> -> vector<8x128xf32>
    %c0_36 = arith.constant 0 : index
    %c0_37 = arith.constant 0 : index
    %65 = vector.load %arg8[%c0_36, %c0_37] : memref<1x128xf32, #tpu.memory_space<vmem>>, vector<1x128xf32>
    %66 = vector.broadcast %65 : vector<1x128xf32> to vector<8x128xf32>
    %67 = arith.addf %64, %66 : vector<8x128xf32>
    %cst_38 = arith.constant dense<0xFF800000> : vector<8xf32>
    %68 = vector.multi_reduction <maximumf>, %67, %cst_38 [1] : vector<8x128xf32> to vector<8xf32>
    %69 = vector.shape_cast %68 : vector<8xf32> to vector<8x1xf32>
    %70 = vector.broadcast %69 : vector<8x1xf32> to vector<8x128xf32>
    %71 = arith.subf %67, %70 : vector<8x128xf32>
    %72 = math.exp %71 : vector<8x128xf32>
    %cst_39 = arith.constant dense<0.000000e+00> : vector<8xf32>
    %73 = vector.multi_reduction <add>, %72, %cst_39 [1] : vector<8x128xf32> to vector<8xf32>
    %74 = vector.shape_cast %73 : vector<8xf32> to vector<8x1xf32>
    %75 = math.log %74 : vector<8x1xf32>
    %76 = vector.broadcast %75 : vector<8x1xf32> to vector<8x128xf32>
    %77 = arith.subf %71, %76 : vector<8x128xf32>
    %c0_40 = arith.constant 0 : index
    %c0_41 = arith.constant 0 : index
    %78 = vector.load %arg9[%c0_40, %c0_41] : memref<8x128xf32, #tpu.memory_space<vmem>>, vector<8x128xf32>
    tpu.vector_store %arg9[%c0_40, %c0_41], %77 {strides = array<i32>} : memref<8x128xf32, #tpu.memory_space<vmem>>, vector<8x128xf32>,
    return
  }
  func.func @transform_0(%arg0: i32) -> (i32, i32) {
    %c0_i32 = arith.constant 0 : i32
    %c0_i32_0 = arith.constant 0 : i32
    return %arg0, %c0_i32 : i32, i32
  }
  func.func @transform_1(%arg0: i32) -> (i32, i32) {
    %c0_i32 = arith.constant 0 : i32
    %c0_i32_0 = arith.constant 0 : i32
    %c0_i32_1 = arith.constant 0 : i32
    return %c0_i32, %c0_i32_0 : i32, i32
  }
  func.func @transform_2(%arg0: i32) -> (i32, i32, i32) {
    %c0_i32 = arith.constant 0 : i32
    %c0_i32_0 = arith.constant 0 : i32
    %c0_i32_1 = arith.constant 0 : i32
    %c0_i32_2 = arith.constant 0 : i32
    return %c0_i32, %c0_i32_0, %c0_i32_1 : i32, i32, i32
  }
  func.func @transform_3(%arg0: i32) -> (i32, i32) {
    %c0_i32 = arith.constant 0 : i32
    %c0_i32_0 = arith.constant 0 : i32
    %c0_i32_1 = arith.constant 0 : i32
    return %c0_i32, %c0_i32_0 : i32, i32
  }
  func.func @transform_4(%arg0: i32) -> (i32, i32) {
    %c0_i32 = arith.constant 0 : i32
    %c0_i32_0 = arith.constant 0 : i32
    %c0_i32_1 = arith.constant 0 : i32
    return %c0_i32, %c0_i32_0 : i32, i32
  }
  func.func @transform_5(%arg0: i32) -> (i32, i32) {
    %c0_i32 = arith.constant 0 : i32
    %c0_i32_0 = arith.constant 0 : i32
    %c0_i32_1 = arith.constant 0 : i32
    return %c0_i32, %c0_i32_0 : i32, i32
  }
  func.func @transform_6(%arg0: i32) -> (i32, i32) {
    %c0_i32 = arith.constant 0 : i32
    %c0_i32_0 = arith.constant 0 : i32
    %c0_i32_1 = arith.constant 0 : i32
    return %c0_i32, %c0_i32_0 : i32, i32
  }
  func.func @transform_7(%arg0: i32) -> (i32, i32) {
    %c0_i32 = arith.constant 0 : i32
    %c0_i32_0 = arith.constant 0 : i32
    %c0_i32_1 = arith.constant 0 : i32
    return %c0_i32, %c0_i32_0 : i32, i32
  }
  func.func @transform_8(%arg0: i32) -> (i32, i32) {
    %c0_i32 = arith.constant 0 : i32
    %c0_i32_0 = arith.constant 0 : i32
    return %arg0, %c0_i32 : i32, i32
  }
}

</mosaic_0001>

<llo_original>
// kernel: length_prior_forward.1
$region0: #{length_prior_forward.1}
  #allocation0 [shape = 'u32[]', space=smem, size = 0x4, offset = 0x4, fixed_abs, tag = 'smem constant byte address 0x4 - core index']
  #allocation1 [shape = 'u32[72,128]{1,0:T(1,128)}', space=vmem, size = 0x9000, scoped, tag = 'internal scratch']
  %s0 = inlined_call_operand.vmem [shape: f32[8,32], index: 0, kind: input, shape index: {}]
  %s1 = inlined_call_operand.vmem [shape: bf16[32,128], index: 1, kind: input, shape index: {}]
  %s2 = inlined_call_operand.hbm [shape: bf16[5,128,128], index: 2, kind: input, shape index: {}]
  %s3 = inlined_call_operand.vmem [shape: f32[6,128], index: 3, kind: input, shape index: {}]
  %s4 = inlined_call_operand.vmem [shape: bf16[128,32], index: 4, kind: input, shape index: {}]
  %s5 = inlined_call_operand.vmem [shape: f32[1,32], index: 5, kind: input, shape index: {}]
  %s6 = inlined_call_operand.vmem [shape: f32[32,128], index: 6, kind: input, shape index: {}]
  %s7 = inlined_call_operand.vmem [shape: f32[1,128], index: 7, kind: input, shape index: {}]
  %s8 = inlined_call_operand.vmem [shape: f32[8,128], index: 8, kind: output, shape index: {}]
  %s9 = sld [smem:[#allocation0]]
  $region46: #{length_prior_forward.1} parent=0
    _
  %s11 = ssub.s32 1, %s9
  %s12 = scalar_select 0, %s11, %s9
  $region1: #{length_prior_forward.1} parent=0
    #allocation2 [shape = 'u8[163840]{0}', space=vmem, size = 0x28000, scoped, tag = 'input window, operand 2, single buffered']
    #allocation3 [shape = 's32[1]{0}', space=sflag, size = 0x4, scoped, tag = 'scoped memory for length_prior_forward.1']
    %13 = vsyncpa [#allocation3], 0
    // Predicated region
    $region2: #{length_prior_forward.1} parent=1 // pred_check
      _
    $region3: #{length_prior_forward.1} parent=1 // pred_check_branch
      %15 = sbr.rel (0) target = $region5
    $region4: #{length_prior_forward.1} parent=1 // pred_region
      _
    $region5: #{length_prior_forward.1} parent=1 // pred_fallthru
      _
    // Predicated region
    $region6: #{length_prior_forward.1} parent=1 // pred_check
      _
    $region7: #{length_prior_forward.1} parent=1 // pred_check_branch
      %17 = sbr.rel (0) target = $region9
    $region8: #{length_prior_forward.1} parent=1 // pred_region
      _
    $region9: #{length_prior_forward.1} parent=1 // pred_fallthru
      _
    // Predicated region
    $region10: #{length_prior_forward.1} parent=1 // pred_check
      _
    $region11: #{length_prior_forward.1} parent=1 // pred_check_branch
      %19 = sbr.rel (0) target = $region13
    $region12: #{length_prior_forward.1} parent=1 // pred_region
      %21 = vsyncadd [#allocation3], 0
      %s22 = sshll.u32 %s2, 4
      %s23 = int_to_ptr.hbm [resolvable:$true] %s22
      %s24 = sshll.u32 [#allocation2], 4
      %s25 = int_to_ptr.vmem [resolvable:$true] %s24
      %30 = dma.hbm_to_vmem [thread:$0]  %s23, 5120, %s25, [#allocation3], 64, 64, 4
    $region13: #{length_prior_forward.1} parent=1 // pred_fallthru
      _
    // Predicated region
    $region14: #{length_prior_forward.1} parent=1 // pred_check
      _
    $region15: #{length_prior_forward.1} parent=1 // pred_check_branch
      %32 = sbr.rel (0) target = $region17
    $region16: #{length_prior_forward.1} parent=1 // pred_region
      _
    $region17: #{length_prior_forward.1} parent=1 // pred_fallthru
      _
    // Predicated region
    $region18: #{length_prior_forward.1} parent=1 // pred_check
      _
    $region19: #{length_prior_forward.1} parent=1 // pred_check_branch
      %34 = sbr.rel (0) target = $region21
    $region20: #{length_prior_forward.1} parent=1 // pred_region
      _
    $region21: #{length_prior_forward.1} parent=1 // pred_fallthru
      _
    // Predicated region
    $region22: #{length_prior_forward.1} parent=1 // pred_check
      _
    $region23: #{length_prior_forward.1} parent=1 // pred_check_branch
      %36 = sbr.rel (0) target = $region25
    $region24: #{length_prior_forward.1} parent=1 // pred_region
      _
    $region25: #{length_prior_forward.1} parent=1 // pred_fallthru
      _
    // Predicated region
    $region26: #{length_prior_forward.1} parent=1 // pred_check
      _
    $region27: #{length_prior_forward.1} parent=1 // pred_check_branch
      %38 = sbr.rel (0) target = $region29
    $region28: #{length_prior_forward.1} parent=1 // pred_region
      _
    $region29: #{length_prior_forward.1} parent=1 // pred_fallthru
      _
    // Predicated region
    $region30: #{length_prior_forward.1} parent=1 // pred_check
      _
    $region31: #{length_prior_forward.1} parent=1 // pred_check_branch
      %40 = sbr.rel (0) target = $region33
    $region32: #{length_prior_forward.1} parent=1 // pred_region
      _
    $region33: #{length_prior_forward.1} parent=1 // pred_fallthru
      _
    // Predicated region
    $region34: #{length_prior_forward.1} parent=1 // pred_check
      _
    $region35: #{length_prior_forward.1} parent=1 // pred_check_branch
      %42 = sbr.rel (0) target = $region37
    $region36: #{length_prior_forward.1} parent=1 // pred_region
      %44 = dma.done [#allocation3], 5120
    $region37: #{length_prior_forward.1} parent=1 // pred_fallthru
      _
    %v46 = vld [vmem:[%s0] sm:$0xff]
    %v47 = vld [vmem:[%s3] sm:$0x3f]
    %v48 = vpack.c.bf16 %v46, %v46
    %v49 = vld [vmem:[%s1] sm:$0xf]
    %v50 = vld [vmem:[%s1 + $0x4] sm:$0xf]
    %v51 = vld [vmem:[%s1 + $0x8] sm:$0xf]
    %v52 = vld [vmem:[%s1 + $0xc] sm:$0xf]
    %v53 = vperm.slane %v47, 0
    %v58 = vunpack.c.l.b16 %v49
    %v59 = vunpack.c.l.b16 %v50
    %v60 = vunpack.c.l.b16 %v51
    %v61 = vunpack.c.l.b16 %v52
    %v62 = vpack.c.b16 %v59, %v58
    %v63 = vpack.c.b16 %v61, %v60
    %vm66 = vcmask 261120
    %v68 = vsel %vm66, %v48, 0
    %70 = vmatpush.bf16.msra.mxu0 0
    %71 = vmatpush.bf16.msra.mxu0 0
    %72 = vmatpush.bf16.msra.mxu0 0
    %73 = vmatpush.bf16.msra.mxu0 0
    %74 = vmatpush.bf16.msra.mxu0 0
    %75 = vmatpush.bf16.msra.mxu0 0
    %76 = vmatpush.bf16.msra.mxu0 %v63
    %77 = vmatpush.bf16.msra.mxu0 %v62
    %78 = vmatmul.bf16.gmra.mxu0 %v68
    %v79 = vpop.f32.mrf.mxu0
    %v80 = vadd.f32 %v53, %v79
    %v81 = vpop.f32.mrf.mxu0
    %82 = vdwg.mxu0
    %v83 = vmax.f32 %v80, 0.0
    %v84 = vpack.c.bf16 %v83, %v83
    %v85 = vld [vmem:[#allocation2] sm:$0xf]
    %v86 = vld [vmem:[#allocation2 + $0x4] sm:$0xf]
    %v87 = vld [vmem:[#allocation2 + $0x8] sm:$0xf]
    %v88 = vld [vmem:[#allocation2 + $0xc] sm:$0xf]
    %v89 = vld [vmem:[#allocation2 + $0x10] sm:$0xf]
    %v90 = vld [vmem:[#allocation2 + $0x14] sm:$0xf]
    %v91 = vld [vmem:[#allocation2 + $0x18] sm:$0xf]
    %v92 = vld [vmem:[#allocation2 + $0x1c] sm:$0xf]
    %v93 = vld [vmem:[#allocation2 + $0x20] sm:$0xf]
    %v94 = vld [vmem:[#allocation2 + $0x24] sm:$0xf]
    %v95 = vld [vmem:[#allocation2 + $0x28] sm:$0xf]
    %v96 = vld [vmem:[#allocation2 + $0x2c] sm:$0xf]
    %v97 = vld [vmem:[#allocation2 + $0x30] sm:$0xf]
    %v98 = vld [vmem:[#allocation2 + $0x34] sm:$0xf]
    %v99 = vld [vmem:[#allocation2 + $0x38] sm:$0xf]
    %v100 = vld [vmem:[#allocation2 + $0x3c] sm:$0xf]
    %v101 = vperm.slane %v47, 1
    %v118 = vunpack.c.l.b16 %v85
    %v119 = vunpack.c.l.b16 %v86
    %v120 = vunpack.c.l.b16 %v87
    %v121 = vunpack.c.l.b16 %v88
    %v122 = vunpack.c.l.b16 %v89
    %v123 = vunpack.c.l.b16 %v90
    %v124 = vunpack.c.l.b16 %v91
    %v125 = vunpack.c.l.b16 %v92
    %v126 = vunpack.c.l.b16 %v93
    %v127 = vunpack.c.l.b16 %v94
    %v128 = vunpack.c.l.b16 %v95
    %v129 = vunpack.c.l.b16 %v96
    %v130 = vunpack.c.l.b16 %v97
    %v131 = vunpack.c.l.b16 %v98
    %v132 = vunpack.c.l.b16 %v99
    %v133 = vunpack.c.l.b16 %v100
    %v134 = vpack.c.b16 %v119, %v118
    %v135 = vpack.c.b16 %v121, %v120
    %v136 = vpack.c.b16 %v123, %v122
    %v137 = vpack.c.b16 %v125, %v124
    %v138 = vpack.c.b16 %v127, %v126
    %v139 = vpack.c.b16 %v129, %v128
    %v140 = vpack.c.b16 %v131, %v130
    %v141 = vpack.c.b16 %v133, %v132
    %150 = vmatpush.bf16.msra.mxu0 %v141
    %151 = vmatpush.bf16.msra.mxu0 %v140
    %152 = vmatpush.bf16.msra.mxu0 %v139
    %153 = vmatpush.bf16.msra.mxu0 %v138
    %154 = vmatpush.bf16.msra.mxu0 %v137
    %155 = vmatpush.bf16.msra.mxu0 %v136
    %156 = vmatpush.bf16.msra.mxu0 %v135
    %157 = vmatpush.bf16.msra.mxu0 %v134
    %158 = vmatmul.bf16.gmra.mxu0 %v84
    %v159 = vpop.f32.mrf.mxu0
    %v160 = vadd.f32 %v101, %v159
    %v161 = vpop.f32.mrf.mxu0
    %162 = vdwg.mxu0
    %v163 = vmax.f32 %v160, 0.0
    %v164 = vpack.c.bf16 %v163, %v163
    %s165 = scalar_lea.vmem [#allocation2], 64
    %v166 = vld [vmem:[%s165] sm:$0xf]
    %v167 = vld [vmem:[%s165 + $0x4] sm:$0xf]
    %v168 = vld [vmem:[%s165 + $0x8] sm:$0xf]
    %v169 = vld [vmem:[%s165 + $0xc] sm:$0xf]
    %v170 = vld [vmem:[%s165 + $0x10] sm:$0xf]
    %v171 = vld [vmem:[%s165 + $0x14] sm:$0xf]
    %v172 = vld [vmem:[%s165 + $0x18] sm:$0xf]
    %v173 = vld [vmem:[%s165 + $0x1c] sm:$0xf]
    %v174 = vld [vmem:[%s165 + $0x20] sm:$0xf]
    %v175 = vld [vmem:[%s165 + $0x24] sm:$0xf]
    %v176 = vld [vmem:[%s165 + $0x28] sm:$0xf]
    %v177 = vld [vmem:[%s165 + $0x2c] sm:$0xf]
    %v178 = vld [vmem:[%s165 + $0x30] sm:$0xf]
    %v179 = vld [vmem:[%s165 + $0x34] sm:$0xf]
    %v180 = vld [vmem:[%s165 + $0x38] sm:$0xf]
    %v181 = vld [vmem:[%s165 + $0x3c] sm:$0xf]
    %v182 = vperm.slane %v47, 2
    %v199 = vunpack.c.l.b16 %v166
    %v200 = vunpack.c.l.b16 %v167
    %v201 = vunpack.c.l.b16 %v168
    %v202 = vunpack.c.l.b16 %v169
    %v203 = vunpack.c.l.b16 %v170
    %v204 = vunpack.c.l.b16 %v171
    %v205 = vunpack.c.l.b16 %v172
    %v206 = vunpack.c.l.b16 %v173
    %v207 = vunpack.c.l.b16 %v174
    %v208 = vunpack.c.l.b16 %v175
    %v209 = vunpack.c.l.b16 %v176
    %v210 = vunpack.c.l.b16 %v177
    %v211 = vunpack.c.l.b16 %v178
    %v212 = vunpack.c.l.b16 %v179
    %v213 = vunpack.c.l.b16 %v180
    %v214 = vunpack.c.l.b16 %v181
    %v215 = vpack.c.b16 %v200, %v199
    %v216 = vpack.c.b16 %v202, %v201
    %v217 = vpack.c.b16 %v204, %v203
    %v218 = vpack.c.b16 %v206, %v205
    %v219 = vpack.c.b16 %v208, %v207
    %v220 = vpack.c.b16 %v210, %v209
    %v221 = vpack.c.b16 %v212, %v211
    %v222 = vpack.c.b16 %v214, %v213
    %231 = vmatpush.bf16.msra.mxu0 %v222
    %232 = vmatpush.bf16.msra.mxu0 %v221
    %233 = vmatpush.bf16.msra.mxu0 %v220
    %234 = vmatpush.bf16.msra.mxu0 %v219
    %235 = vmatpush.bf16.msra.mxu0 %v218
    %236 = vmatpush.bf16.msra.mxu0 %v217
    %237 = vmatpush.bf16.msra.mxu0 %v216
    %238 = vmatpush.bf16.msra.mxu0 %v215
    %239 = vmatmul.bf16.gmra.mxu0 %v164
    %v240 = vpop.f32.mrf.mxu0
    %v241 = vadd.f32 %v182, %v240
    %v242 = vpop.f32.mrf.mxu0
    %243 = vdwg.mxu0
    %v244 = vmax.f32 %v241, 0.0
    %v245 = vpack.c.bf16 %v244, %v244
    %s246 = scalar_lea.vmem [#allocation2], 128
    %v247 = vld [vmem:[%s246] sm:$0xf]
    %v248 = vld [vmem:[%s246 + $0x4] sm:$0xf]
    %v249 = vld [vmem:[%s246 + $0x8] sm:$0xf]
    %v250 = vld [vmem:[%s246 + $0xc] sm:$0xf]
    %v251 = vld [vmem:[%s246 + $0x10] sm:$0xf]
    %v252 = vld [vmem:[%s246 + $0x14] sm:$0xf]
    %v253 = vld [vmem:[%s246 + $0x18] sm:$0xf]
    %v254 = vld [vmem:[%s246 + $0x1c] sm:$0xf]
    %v255 = vld [vmem:[%s246 + $0x20] sm:$0xf]
    %v256 = vld [vmem:[%s246 + $0x24] sm:$0xf]
    %v257 = vld [vmem:[%s246 + $0x28] sm:$0xf]
    %v258 = vld [vmem:[%s246 + $0x2c] sm:$0xf]
    %v259 = vld [vmem:[%s246 + $0x30] sm:$0xf]
    %v260 = vld [vmem:[%s246 + $0x34] sm:$0xf]
    %v261 = vld [vmem:[%s246 + $0x38] sm:$0xf]
    %v262 = vld [vmem:[%s246 + $0x3c] sm:$0xf]
    %v263 = vperm.slane %v47, 3
    %v280 = vunpack.c.l.b16 %v247
    %v281 = vunpack.c.l.b16 %v248
    %v282 = vunpack.c.l.b16 %v249
    %v283 = vunpack.c.l.b16 %v250
    %v284 = vunpack.c.l.b16 %v251
    %v285 = vunpack.c.l.b16 %v252
    %v286 = vunpack.c.l.b16 %v253
    %v287 = vunpack.c.l.b16 %v254
    %v288 = vunpack.c.l.b16 %v255
    %v289 = vunpack.c.l.b16 %v256
    %v290 = vunpack.c.l.b16 %v257
    %v291 = vunpack.c.l.b16 %v258
    %v292 = vunpack.c.l.b16 %v259
    %v293 = vunpack.c.l.b16 %v260
    %v294 = vunpack.c.l.b16 %v261
    %v295 = vunpack.c.l.b16 %v262
    %v296 = vpack.c.b16 %v281, %v280
    %v297 = vpack.c.b16 %v283, %v282
    %v298 = vpack.c.b16 %v285, %v284
    %v299 = vpack.c.b16 %v287, %v286
    %v300 = vpack.c.b16 %v289, %v288
    %v301 = vpack.c.b16 %v291, %v290
    %v302 = vpack.c.b16 %v293, %v292
    %v303 = vpack.c.b16 %v295, %v294
    %312 = vmatpush.bf16.msra.mxu0 %v303
    %313 = vmatpush.bf16.msra.mxu0 %v302
    %314 = vmatpush.bf16.msra.mxu0 %v301
    %315 = vmatpush.bf16.msra.mxu0 %v300
    %316 = vmatpush.bf16.msra.mxu0 %v299
    %317 = vmatpush.bf16.msra.mxu0 %v298
    %318 = vmatpush.bf16.msra.mxu0 %v297
    %319 = vmatpush.bf16.msra.mxu0 %v296
    %320 = vmatmul.bf16.gmra.mxu0 %v245
    %v321 = vpop.f32.mrf.mxu0
    %v322 = vadd.f32 %v263, %v321
    %v323 = vpop.f32.mrf.mxu0
    %324 = vdwg.mxu0
    %v325 = vmax.f32 %v322, 0.0
    %v326 = vpack.c.bf16 %v325, %v325
    %s327 = scalar_lea.vmem [#allocation2], 192
    %v328 = vld [vmem:[%s327] sm:$0xf]
    %v329 = vld [vmem:[%s327 + $0x4] sm:$0xf]
    %v330 = vld [vmem:[%s327 + $0x8] sm:$0xf]
    %v331 = vld [vmem:[%s327 + $0xc] sm:$0xf]
    %v332 = vld [vmem:[%s327 + $0x10] sm:$0xf]
    %v333 = vld [vmem:[%s327 + $0x14] sm:$0xf]
    %v334 = vld [vmem:[%s327 + $0x18] sm:$0xf]
    %v335 = vld [vmem:[%s327 + $0x1c] sm:$0xf]
    %v336 = vld [vmem:[%s327 + $0x20] sm:$0xf]
    %v337 = vld [vmem:[%s327 + $0x24] sm:$0xf]
    %v338 = vld [vmem:[%s327 + $0x28] sm:$0xf]
    %v339 = vld [vmem:[%s327 + $0x2c] sm:$0xf]
    %v340 = vld [vmem:[%s327 + $0x30] sm:$0xf]
    %v341 = vld [vmem:[%s327 + $0x34] sm:$0xf]
    %v342 = vld [vmem:[%s327 + $0x38] sm:$0xf]
    %v343 = vld [vmem:[%s327 + $0x3c] sm:$0xf]
    %v344 = vperm.slane %v47, 4
    %v361 = vunpack.c.l.b16 %v328
    %v362 = vunpack.c.l.b16 %v329
    %v363 = vunpack.c.l.b16 %v330
    %v364 = vunpack.c.l.b16 %v331
    %v365 = vunpack.c.l.b16 %v332
    %v366 = vunpack.c.l.b16 %v333
    %v367 = vunpack.c.l.b16 %v334
    %v368 = vunpack.c.l.b16 %v335
    %v369 = vunpack.c.l.b16 %v336
    %v370 = vunpack.c.l.b16 %v337
    %v371 = vunpack.c.l.b16 %v338
    %v372 = vunpack.c.l.b16 %v339
    %v373 = vunpack.c.l.b16 %v340
    %v374 = vunpack.c.l.b16 %v341
    %v375 = vunpack.c.l.b16 %v342
    %v376 = vunpack.c.l.b16 %v343
    %v377 = vpack.c.b16 %v362, %v361
    %v378 = vpack.c.b16 %v364, %v363
    %v379 = vpack.c.b16 %v366, %v365
    %v380 = vpack.c.b16 %v368, %v367
    %v381 = vpack.c.b16 %v370, %v369
    %v382 = vpack.c.b16 %v372, %v371
    %v383 = vpack.c.b16 %v374, %v373
    %v384 = vpack.c.b16 %v376, %v375
    %393 = vmatpush.bf16.msra.mxu0 %v384
    %394 = vmatpush.bf16.msra.mxu0 %v383
    %395 = vmatpush.bf16.msra.mxu0 %v382
    %396 = vmatpush.bf16.msra.mxu0 %v381
    %397 = vmatpush.bf16.msra.mxu0 %v380
    %398 = vmatpush.bf16.msra.mxu0 %v379
    %399 = vmatpush.bf16.msra.mxu0 %v378
    %400 = vmatpush.bf16.msra.mxu0 %v377
    %401 = vmatmul.bf16.gmra.mxu0 %v326
    %v402 = vpop.f32.mrf.mxu0
    %v403 = vadd.f32 %v344, %v402
    %v404 = vpop.f32.mrf.mxu0
    %405 = vdwg.mxu0
    %v406 = vmax.f32 %v403, 0.0
    %v407 = vpack.c.bf16 %v406, %v406
    %s408 = scalar_lea.vmem [#allocation2], 256
    %v409 = vld [vmem:[%s408] sm:$0xf]
    %v410 = vld [vmem:[%s408 + $0x4] sm:$0xf]
    %v411 = vld [vmem:[%s408 + $0x8] sm:$0xf]
    %v412 = vld [vmem:[%s408 + $0xc] sm:$0xf]
    %v413 = vld [vmem:[%s408 + $0x10] sm:$0xf]
    %v414 = vld [vmem:[%s408 + $0x14] sm:$0xf]
    %v415 = vld [vmem:[%s408 + $0x18] sm:$0xf]
    %v416 = vld [vmem:[%s408 + $0x1c] sm:$0xf]
    %v417 = vld [vmem:[%s408 + $0x20] sm:$0xf]
    %v418 = vld [vmem:[%s408 + $0x24] sm:$0xf]
    %v419 = vld [vmem:[%s408 + $0x28] sm:$0xf]
    %v420 = vld [vmem:[%s408 + $0x2c] sm:$0xf]
    %v421 = vld [vmem:[%s408 + $0x30] sm:$0xf]
    %v422 = vld [vmem:[%s408 + $0x34] sm:$0xf]
    %v423 = vld [vmem:[%s408 + $0x38] sm:$0xf]
    %v424 = vld [vmem:[%s408 + $0x3c] sm:$0xf]
    %v425 = vperm.slane %v47, 5
    %v442 = vunpack.c.l.b16 %v409
    %v443 = vunpack.c.l.b16 %v410
    %v444 = vunpack.c.l.b16 %v411
    %v445 = vunpack.c.l.b16 %v412
    %v446 = vunpack.c.l.b16 %v413
    %v447 = vunpack.c.l.b16 %v414
    %v448 = vunpack.c.l.b16 %v415
    %v449 = vunpack.c.l.b16 %v416
    %v450 = vunpack.c.l.b16 %v417
    %v451 = vunpack.c.l.b16 %v418
    %v452 = vunpack.c.l.b16 %v419
    %v453 = vunpack.c.l.b16 %v420
    %v454 = vunpack.c.l.b16 %v421
    %v455 = vunpack.c.l.b16 %v422
    %v456 = vunpack.c.l.b16 %v423
    %v457 = vunpack.c.l.b16 %v424
    %v458 = vpack.c.b16 %v443, %v442
    %v459 = vpack.c.b16 %v445, %v444
    %v460 = vpack.c.b16 %v447, %v446
    %v461 = vpack.c.b16 %v449, %v448
    %v462 = vpack.c.b16 %v451, %v450
    %v463 = vpack.c.b16 %v453, %v452
    %v464 = vpack.c.b16 %v455, %v454
    %v465 = vpack.c.b16 %v457, %v456
    %474 = vmatpush.bf16.msra.mxu0 %v465
    %475 = vmatpush.bf16.msra.mxu0 %v464
    %476 = vmatpush.bf16.msra.mxu0 %v463
    %477 = vmatpush.bf16.msra.mxu0 %v462
    %478 = vmatpush.bf16.msra.mxu0 %v461
    %479 = vmatpush.bf16.msra.mxu0 %v460
    %480 = vmatpush.bf16.msra.mxu0 %v459
    %481 = vmatpush.bf16.msra.mxu0 %v458
    %482 = vmatmul.bf16.gmra.mxu0 %v407
    %v483 = vpop.f32.mrf.mxu0
    %v484 = vadd.f32 %v425, %v483
    %v485 = vpop.f32.mrf.mxu0
    %486 = vdwg.mxu0
    %v487 = vmax.f32 %v484, 0.0
    %v488 = vpack.c.bf16 %v487, %v487
    %v489 = vld [vmem:[%s4] sm:$0xf]
    %v490 = vld [vmem:[%s4 + $0x4] sm:$0xf]
    %v491 = vld [vmem:[%s4 + $0x8] sm:$0xf]
    %v492 = vld [vmem:[%s4 + $0xc] sm:$0xf]
    %v493 = vld [vmem:[%s4 + $0x10] sm:$0xf]
    %v494 = vld [vmem:[%s4 + $0x14] sm:$0xf]
    %v495 = vld [vmem:[%s4 + $0x18] sm:$0xf]
    %v496 = vld [vmem:[%s4 + $0x1c] sm:$0xf]
    %v497 = vld [vmem:[%s4 + $0x20] sm:$0xf]
    %v498 = vld [vmem:[%s4 + $0x24] sm:$0xf]
    %v499 = vld [vmem:[%s4 + $0x28] sm:$0xf]
    %v500 = vld [vmem:[%s4 + $0x2c] sm:$0xf]
    %v501 = vld [vmem:[%s4 + $0x30] sm:$0xf]
    %v502 = vld [vmem:[%s4 + $0x34] sm:$0xf]
    %v503 = vld [vmem:[%s4 + $0x38] sm:$0xf]
    %v504 = vld [vmem:[%s4 + $0x3c] sm:$0xf]
    %v505 = vld [vmem:[%s5] sm:$0x1]
    %v507 = vperm.slane %v505, 0
    %v525 = vunpack.c.l.b16 %v489
    %v526 = vunpack.c.l.b16 %v490
    %v527 = vunpack.c.l.b16 %v491
    %v528 = vunpack.c.l.b16 %v492
    %v529 = vunpack.c.l.b16 %v493
    %v530 = vunpack.c.l.b16 %v494
    %v531 = vunpack.c.l.b16 %v495
    %v532 = vunpack.c.l.b16 %v496
    %v533 = vunpack.c.l.b16 %v497
    %v534 = vunpack.c.l.b16 %v498
    %v535 = vunpack.c.l.b16 %v499
    %v536 = vunpack.c.l.b16 %v500
    %v537 = vunpack.c.l.b16 %v501
    %v538 = vunpack.c.l.b16 %v502
    %v539 = vunpack.c.l.b16 %v503
    %v540 = vunpack.c.l.b16 %v504
    %v541 = vpack.c.b16 %v526, %v525
    %v542 = vpack.c.b16 %v528, %v527
    %v543 = vpack.c.b16 %v530, %v529
    %v544 = vpack.c.b16 %v532, %v531
    %v545 = vpack.c.b16 %v534, %v533
    %v546 = vpack.c.b16 %v536, %v535
    %v547 = vpack.c.b16 %v538, %v537
    %v548 = vpack.c.b16 %v540, %v539
    %557 = vmatpush.bf16.msra.mxu0 %v548
    %558 = vmatpush.bf16.msra.mxu0 %v547
    %559 = vmatpush.bf16.msra.mxu0 %v546
    %560 = vmatpush.bf16.msra.mxu0 %v545
    %561 = vmatpush.bf16.msra.mxu0 %v544
    %562 = vmatpush.bf16.msra.mxu0 %v543
    %563 = vmatpush.bf16.msra.mxu0 %v542
    %564 = vmatpush.bf16.msra.mxu0 %v541
    %565 = vmatmul.bf16.gmra.mxu0 %v488
    %v566 = vpop.f32.mrf.mxu0
    %v567 = vadd.f32 %v507, %v566
    %v568 = vpop.f32.mrf.mxu0
    %569 = vdwg.mxu0
    %v570 = vmax.f32 %v567, 0.0
    %v571 = vld [vmem:[%s6] sm:$0xff]
    %v572 = vld [vmem:[%s6 + $0x8] sm:$0xff]
    %v573 = vld [vmem:[%s6 + $0x10] sm:$0xff]
    %v574 = vld [vmem:[%s6 + $0x18] sm:$0xff]
    %v575 = vld [vmem:[%s7] sm:$0x1]
    %v577 = vperm.slane %v575, 0
    %v580 = vsel %vm66, %v570, 0
    %582 = vmatpush.msra.mxu0 0.0
    %583 = vmatpush.msra.mxu0 0.0
    %584 = vmatpush.msra.mxu0 0.0
    %585 = vmatpush.msra.mxu0 0.0
    %586 = vmatpush.msra.mxu0 0.0
    %587 = vmatpush.msra.mxu0 0.0
    %588 = vmatpush.msra.mxu0 0.0
    %589 = vmatpush.msra.mxu0 0.0
    %590 = vmatpush.msra.mxu0 0.0
    %591 = vmatpush.msra.mxu0 0.0
    %592 = vmatpush.msra.mxu0 0.0
    %593 = vmatpush.msra.mxu0 0.0
    %594 = vmatpush.msra.mxu0 %v574
    %595 = vmatpush.msra.mxu0 %v573
    %596 = vmatpush.msra.mxu0 %v572
    %597 = vmatpush.msra.mxu0 %v571
    %598 = vmatmul.f32.gmra.mxu0 %v580
    %v599 = vpop.f32.mrf.mxu0
    %v600 = vadd.f32 %v577, %v599
    %601 = vdwg.mxu0
    %602 = vmax.xlane.f32.xlu0 %v600
    %v603 = vpop.xlane.xlu0 %602
    %v604 = vsub.f32 %v600, %v603
    %v605 = vmul.f32 %v604, 1.442695
    %v606 = vpow.pop %v605
    %607 = vadd.xlane.f32.xlu0 %v606
    %v608 = vpop.xlane.xlu0 %607
    %v609 = vlog2.pop %v608
    %v610 = vmul.f32 %v609, 0.6931472
    %v611 = vsub.f32 %v604, %v610
    %612 = vst [vmem:[%s8] sm:$0xff] %v611
    // Predicated region
    $region38: #{length_prior_forward.1} parent=1 // pred_check
      _
    $region39: #{length_prior_forward.1} parent=1 // pred_check_branch
      %614 = sbr.rel (0) target = $region41
    $region40: #{length_prior_forward.1} parent=1 // pred_region
      _
    $region41: #{length_prior_forward.1} parent=1 // pred_fallthru
      _
    // Predicated region
    $region42: #{length_prior_forward.1} parent=1 // pred_check
      _
    $region43: #{length_prior_forward.1} parent=1 // pred_check_branch
      %616 = sbr.rel (0) target = $region45
    $region44: #{length_prior_forward.1} parent=1 // pred_region
      _
    $region45: #{length_prior_forward.1} parent=1 // pred_fallthru
      _
    %617 = vsyncpa [#allocation3], 1

</llo_original>
